<compile_context>
chip_gen: v5e
topology: v5e:2x2
jax: 0.10.0
libtpu: 0.0.40
codegen_flags: <defaults>
</compile_context>

<pallas_src>
import jax
import jax.numpy as jnp
from jax.experimental import pallas as pl
from jax.experimental.pallas import tpu as pltpu

_LN2 = 0.6931471805599453


def _cosh_kernel(x_ref, o_ref):
    x = x_ref[...].astype(jnp.float32)
    # t = 0.5 * exp(|x|)  (single EUP exp); cosh(x) = t + 0.25 / t
    t = jnp.exp(jnp.abs(x) - _LN2)
    o_ref[...] = (t + 0.25 / t).astype(o_ref.dtype)


def cosh_pallas(x: jax.Array) -> jax.Array:
    """Elementwise cosh via a Pallas TPU kernel (any rank, any float dtype)."""
    orig_shape = x.shape
    orig_dtype = x.dtype
    n = x.size
    if n == 0:
        return x

    flat = x.reshape(-1)

    # Lane-dense width: largest multiple of 128 that divides n, else pad to 128.
    pad = 0
    width = 128
    for w in (1024, 512, 256, 128):
        if n % w == 0:
            width = w
            break
    else:
        pad = (-n) % 128
        flat = jnp.pad(flat, (0, pad))

    rows = flat.size // width
    x2 = flat.reshape(rows, width)

    itemsize = jnp.dtype(orig_dtype).itemsize
    # Sublane multiple: 8 for 4-byte, 16 for 2-byte, 32 for 1-byte dtypes.
    sub = max(8, 32 // max(itemsize, 1))

    # Per-generation block sizing.  Pallas double-buffers input and output,
    # so resident working set ~= 4 * block_bytes.  Keep that <= ~16 MiB on
    # v7x (64 MiB VMEM/TC) and <= ~32 MiB on v5e/v6e (128 MiB VMEM, raised
    # scoped limit below).
    kind = ""
    try:
        kind = jax.devices()[0].device_kind.lower()
    except Exception:
        pass
    is_v7 = "v7" in kind
    target_block_bytes = (4 if is_v7 else 8) * 1024 * 1024

    tile_rows = (target_block_bytes // (width * itemsize)) // sub * sub
    tile_rows = max(sub, tile_rows)
    if tile_rows > rows:
        tile_rows = rows  # block == full row extent (always legal)

    grid = (pl.cdiv(rows, tile_rows),)

    cp_kwargs = dict(dimension_semantics=("parallel",))
    if not is_v7:
        # v5e/v6e: 128 MiB physical VMEM; raise scoped limit so the larger
        # double-buffered blocks keep full pipelining.
        cp_kwargs["vmem_limit_bytes"] = 64 * 1024 * 1024

    out2 = pl.pallas_call(
        _cosh_kernel,
        out_shape=jax.ShapeDtypeStruct((rows, width), orig_dtype),
        grid=grid,
        in_specs=[pl.BlockSpec((tile_rows, width), lambda i: (i, 0))],
        out_specs=pl.BlockSpec((tile_rows, width), lambda i: (i, 0)),
        compiler_params=pltpu.CompilerParams(**cp_kwargs),
    )(x2)

    out_flat = out2.reshape(-1)
    if pad:
        out_flat = out_flat[:n]
    return out_flat.reshape(orig_shape)


if __name__ == "__main__":
    key = jax.random.PRNGKey(0)
    # Small shape consistent with a generic nnodely tensor:
    # (batch=2, channels=4, seq=8, hidden=32)
    x = jax.random.normal(key, (2, 4, 8, 32), dtype=jnp.float32)

    y = jax.block_until_ready(cosh_pallas(x))

    # Correctness vs plain JAX reference (same semantics as torch.cosh).
    y_ref = jnp.cosh(x)
    assert y.shape == x.shape and y.dtype == x.dtype
    assert jnp.allclose(y, y_ref, rtol=1e-6, atol=1e-6), "mismatch vs jnp.cosh"

    print("KERNEL_OK")
</pallas_src>

<mosaic_0001>
module attributes {stable_mosaic.version = 11 : i64} {
  func.func @_cosh_kernel(%arg0: i32, %arg1: memref<2x1024xf32, #tpu.memory_space<vmem>>, %arg2: memref<2x1024xf32, #tpu.memory_space<vmem>>) attributes {dimension_semantics = [#tpu.dimension_semantics<parallel>], iteration_bounds = array<i64: 1>, scalar_prefetch = 0 : i64, scratch_operands = 0 : i64, tpu.core_type = #tpu.core_type<tc>, window_params = [{transform_indices = @transform_0, window_bounds = array<i64: 2, 1024>}, {transform_indices = @transform_1, window_bounds = array<i64: 2, 1024>}]} {
    %c0 = arith.constant 0 : index
    %c0_0 = arith.constant 0 : index
    %0 = vector.load %arg1[%c0, %c0_0] : memref<2x1024xf32, #tpu.memory_space<vmem>>, vector<2x1024xf32>
    %1 = math.absf %0 : vector<2x1024xf32>
    %cst = arith.constant 0.693147182 : f32
    %2 = vector.broadcast %cst : f32 to vector<2x1024xf32>
    %3 = arith.subf %1, %2 : vector<2x1024xf32>
    %4 = math.exp %3 : vector<2x1024xf32>
    %cst_1 = arith.constant 2.500000e-01 : f32
    %5 = vector.broadcast %cst_1 : f32 to vector<2x1024xf32>
    %6 = arith.divf %5, %4 : vector<2x1024xf32>
    %7 = arith.addf %4, %6 : vector<2x1024xf32>
    %c0_2 = arith.constant 0 : index
    %c0_3 = arith.constant 0 : index
    %8 = vector.load %arg2[%c0_2, %c0_3] : memref<2x1024xf32, #tpu.memory_space<vmem>>, vector<2x1024xf32>
    tpu.vector_store %arg2[%c0_2, %c0_3], %7 {strides = array<i32>} : memref<2x1024xf32, #tpu.memory_space<vmem>>, vector<2x1024xf32>,
    return
  }
  func.func @transform_0(%arg0: i32) -> (i32, i32) {
    %c0_i32 = arith.constant 0 : i32
    %c0_i32_0 = arith.constant 0 : i32
    return %arg0, %c0_i32 : i32, i32
  }
  func.func @transform_1(%arg0: i32) -> (i32, i32) {
    %c0_i32 = arith.constant 0 : i32
    %c0_i32_0 = arith.constant 0 : i32
    return %arg0, %c0_i32 : i32, i32
  }
}

</mosaic_0001>

<llo_original>
// kernel: tpu_custom_call.1
$region0: #{tpu_custom_call.1}
  #allocation0 [shape = 'u32[]', space=smem, size = 0x4, offset = 0x4, fixed_abs, tag = 'smem constant byte address 0x4 - core index']
  #allocation1 [shape = 'u32[72,128]{1,0:T(1,128)}', space=vmem, size = 0x9000, scoped, tag = 'internal scratch']
  %s0 = inlined_call_operand.hbm [shape: f32[2,1024], index: 0, kind: input, shape index: {}]
  %s1 = inlined_call_operand.hbm [shape: f32[2,1024], index: 1, kind: output, shape index: {}]
  %s2 = sld [smem:[#allocation0]]
  $region18: #{tpu_custom_call.1} parent=0
    _
  %s4 = ssub.s32 1, %s2
  %s5 = scalar_select 0, %s4, %s2
  $region1: #{tpu_custom_call.1} parent=0
    #allocation2 [shape = 'u8[8192]{0}', space=vmem, size = 0x2000, scoped, tag = 'input window, operand 0, single buffered']
    #allocation3 [shape = 's32[1]{0}', space=sflag, size = 0x4, scoped, tag = 'scoped memory for tpu_custom_call.1']
    #allocation4 [shape = 's32[1]{0}', space=sflag, size = 0x4, scoped, tag = 'scoped memory for tpu_custom_call.1']
    #allocation5 [shape = 'u8[8192]{0}', space=vmem, size = 0x2000, scoped, tag = 'output window, operand 0, single buffered']
    %6 = vsyncpa [#allocation3], 0
    %7 = vsyncpa [#allocation4], 0
    // Predicated region
    $region2: #{tpu_custom_call.1} parent=1 // pred_check
      _
    $region3: #{tpu_custom_call.1} parent=1 // pred_check_branch
      %9 = sbr.rel (0) target = $region5
    $region4: #{tpu_custom_call.1} parent=1 // pred_region
      %11 = vsyncadd [#allocation3], 0
      %s13 = sshll.u32 %s0, 4
      %s14 = int_to_ptr.hbm [resolvable:$true] %s13
      %s15 = sshll.u32 [#allocation2], 4
      %s16 = int_to_ptr.vmem [resolvable:$true] %s15
      %18 = dma.hbm_to_vmem [thread:$0]  %s14, 256, %s16, [#allocation3]
    $region5: #{tpu_custom_call.1} parent=1 // pred_fallthru
      _
    // Predicated region
    $region6: #{tpu_custom_call.1} parent=1 // pred_check
      _
    $region7: #{tpu_custom_call.1} parent=1 // pred_check_branch
      %20 = sbr.rel (0) target = $region9
    $region8: #{tpu_custom_call.1} parent=1 // pred_region
      %22 = dma.done [#allocation3], 256
    $region9: #{tpu_custom_call.1} parent=1 // pred_fallthru
      _
    %v23 = vld [vmem:[#allocation2] sm:$0xff]
    %v24 = vld [vmem:[#allocation2 + $0x8] sm:$0xff]
    %v25 = vand.u32 2147483647, %v23
    %v26 = vand.u32 2147483647, %v24
    %v27 = vsub.f32 %v25, 0.6931472
    %v28 = vsub.f32 %v26, 0.6931472
    %v29 = vmul.f32 %v27, 1.442695
    %v30 = vpow.pop %v29
    %v31 = vmul.f32 %v28, 1.442695
    %v32 = vpow.pop %v31
    %v33 = vrcp.pop %v30
    %v34 = vmul.f32 %v30, %v33
    %v35 = vsub.f32 1.0, %v34
    %v36 = vmul.f32 %v33, %v35
    %v37 = vadd.f32 %v33, %v36
    %vm38 = vweird.f32 %v30
    %vm39 = vweird.f32 %v33
    %vm40 = vmor %vm38, %vm39
    %v41 = vsel %vm40, %v33, %v37
    %v42 = vand.u32 2147483647, %v30
    %vm43 = vcmp.eq.f32.partialorder %v42, 8.507059e+37
    %v44 = vand.u32 %v30, 2147483648
    %v45 = vor.u32 1.1754944e-38, %v44
    %v46 = vsel %vm43, %v45, %v41
    %v47 = vmul.f32 0.25, %v46
    %v48 = vrcp.pop %v32
    %v49 = vmul.f32 %v32, %v48
    %v50 = vsub.f32 1.0, %v49
    %v51 = vmul.f32 %v48, %v50
    %v52 = vadd.f32 %v48, %v51
    %vm53 = vweird.f32 %v32
    %vm54 = vweird.f32 %v48
    %vm55 = vmor %vm53, %vm54
    %v56 = vsel %vm55, %v48, %v52
    %v57 = vand.u32 2147483647, %v32
    %vm58 = vcmp.eq.f32.partialorder %v57, 8.507059e+37
    %v59 = vand.u32 %v32, 2147483648
    %v60 = vor.u32 1.1754944e-38, %v59
    %v61 = vsel %vm58, %v60, %v56
    %v62 = vmul.f32 0.25, %v61
    %v63 = vadd.f32 %v30, %v47
    %v64 = vadd.f32 %v32, %v62
    %65 = vst [vmem:[#allocation5] sm:$0xff] %v63
    %66 = vst [vmem:[#allocation5 + $0x8] sm:$0xff] %v64
    // Predicated region
    $region10: #{tpu_custom_call.1} parent=1 // pred_check
      _
    $region11: #{tpu_custom_call.1} parent=1 // pred_check_branch
      %68 = sbr.rel (0) target = $region13
    $region12: #{tpu_custom_call.1} parent=1 // pred_region
      %70 = vsyncadd [#allocation4], 0
      %s72 = sshll.u32 [#allocation5], 4
      %s73 = int_to_ptr.vmem [resolvable:$true] %s72
      %s74 = sshll.u32 %s1, 4
      %s75 = int_to_ptr.hbm [resolvable:$true] %s74
      %77 = dma.vmem_to_hbm [thread:$0]  %s73, 256, %s75, [#allocation4]
    $region13: #{tpu_custom_call.1} parent=1 // pred_fallthru
      _
    // Predicated region
    $region14: #{tpu_custom_call.1} parent=1 // pred_check
      _
    $region15: #{tpu_custom_call.1} parent=1 // pred_check_branch
      %79 = sbr.rel (0) target = $region17
    $region16: #{tpu_custom_call.1} parent=1 // pred_region
      %81 = dma.done [#allocation4], 256
    $region17: #{tpu_custom_call.1} parent=1 // pred_fallthru
      _
    %82 = vsyncpa [#allocation3], 1
    %83 = vsyncpa [#allocation4], 1

</llo_original>
